<compile_context>
chip_gen: v7x
topology: tpu7x:2x2x1
jax: 0.10.0
libtpu: 0.0.40
codegen_flags: <defaults>
</compile_context>

<pallas_src>
import functools
import math

import jax
import jax.numpy as jnp
from jax.experimental import pallas as pl
from jax.experimental.pallas import tpu as pltpu

_EPS = 1e-07
_BETA = 1.0
_LANES = 128
_MAX_BLOCK_ROWS = 2048     # 2048 x 128 x 4B = 1 MiB f32 per input per grid step
_MASK_LOGIT = -1e9         # tanh saturates exactly -> all four contributions are exactly 0


def _num_parallel_cores():
    """2 on multi-TensorCore chips (v4 / v5p / v7x), else 1 (v5e / v6e single TC)."""
    try:
        kind = jax.devices()[0].device_kind.lower()
    except Exception:
        return 1
    if any(tag in kind for tag in ("v4", "v5p", "v7")):
        return 2
    return 1


def _loss_kernel(pr_ref, gt_ref, out_ref, *, nblk, block_rows, nsub, total_rows, needs_mask):
    """Accumulate [sum(bce), sum(sigmoid(x)), sum(y), sum(y*sigmoid(x))] into out_ref.

    out_ref block is (1, 4, 8, 128) and its block index is constant along the reduction
    grid axis, so it stays VMEM-resident; each quantity is kept as an (8, 128) vreg of
    partial sums (the cross-sublane/lane reduction happens once, in the wrapper).
    """
    j = pl.program_id(1)

    @pl.when(j == 0)
    def _():
        out_ref[...] = jnp.zeros_like(out_ref)

    x = pr_ref[...].astype(jnp.float32)    # (block_rows, 128) logits
    y = gt_ref[...].astype(jnp.float32)    # (block_rows, 128) targets

    if needs_mask:
        # Rows at/after `total_rows` belong to the padded tail of the last (possibly
        # clamped) block: force (logit, target) to values whose contributions are all
        # exactly 0 (tanh(-5e8) == -1 exactly), also neutralizing any garbage/NaN data.
        i = pl.program_id(0)
        base = (i * nblk + j) * block_rows
        row = base + jax.lax.broadcasted_iota(jnp.int32, (block_rows, 1), 0)
        valid = row < total_rows
        x = jnp.where(valid, x, _MASK_LOGIT)
        y = jnp.where(valid, y, 0.0)

    # Single tanh drives both the sigmoid and the stable BCE log term:
    #   sigmoid(x)       = 0.5 + 0.5 * tanh(x/2)
    #   log1p(exp(-|x|)) = -log(sigmoid(|x|)) = -log(0.5 + 0.5 * |tanh(x/2)|)
    t = jnp.tanh(0.5 * x)
    p = 0.5 + 0.5 * t
    bce = jnp.maximum(x, 0.0) - x * y - jnp.log(0.5 + 0.5 * jnp.abs(t))
    tp = y * p

    def fold(a):
        # (block_rows, 128) -> (8, 128): VPU vreg-wise adds only (no per-step XLU).
        return jnp.sum(a.reshape(nsub, 8, _LANES), axis=0)

    out_ref[0, 0] += fold(bce)   # sum of BCE elements
    out_ref[0, 1] += fold(p)     # sum of activated predictions
    out_ref[0, 2] += fold(y)     # sum of ground truth
    out_ref[0, 3] += fold(tp)    # soft true positives


def bce_dice_jaccard_loss(y_pr, y_gt, *, eps=_EPS, beta=_BETA):
    """y_pr: logits (N, C, H, W); y_gt: targets, same shape. Returns scalar f32 loss."""
    assert y_pr.shape == y_gt.shape
    n_total = math.prod(y_pr.shape)

    pr_flat = y_pr.reshape(-1)
    gt_flat = y_gt.reshape(-1)
    rem = n_total % _LANES
    if rem:
        # Rare path (element count not a multiple of 128): pad only to the next lane
        # boundary; the pad constants contribute exactly 0 to every accumulated sum.
        # TODO(synk): this XLA pad re-copies the inputs; the common 128-aligned path is
        # fully copy-free (tail handled by the in-kernel mask instead).
        pad = _LANES - rem
        pr_flat = jnp.pad(pr_flat, (0, pad), constant_values=_MASK_LOGIT)
        gt_flat = jnp.pad(gt_flat, (0, pad), constant_values=0)
    rows = pr_flat.shape[0] // _LANES
    pr2d = pr_flat.reshape(rows, _LANES)   # free: contiguous row-major reinterpretation
    gt2d = gt_flat.reshape(rows, _LANES)

    ncores = _num_parallel_cores()
    # Block rows: multiple of 16 (bf16 sublane packing), capped at _MAX_BLOCK_ROWS,
    # sized so small inputs are not over-blocked.
    block_rows = min(_MAX_BLOCK_ROWS, ((pl.cdiv(rows, ncores) + 15) // 16) * 16)
    nblk = pl.cdiv(rows, ncores * block_rows)        # grid steps per core
    nsub = block_rows // 8

    covered_rows = ncores * nblk * block_rows
    needs_mask = covered_rows != rows                # partial / out-of-range tail exists
    last_block = pl.cdiv(rows, block_rows) - 1
    needs_clamp = (ncores * nblk - 1) > last_block   # only possible when ncores > 1

    if needs_clamp:
        # Keep the DMA in bounds for logical blocks past the end of the array;
        # the in-kernel row mask zeroes their contribution.
        def in_index_map(i, j):
            return (jnp.minimum(i * nblk + j, last_block), 0)
    else:
        def in_index_map(i, j):
            return (i * nblk + j, 0)

    kernel = functools.partial(
        _loss_kernel, nblk=nblk, block_rows=block_rows, nsub=nsub,
        total_rows=rows, needs_mask=needs_mask)

    n_padded = rows * _LANES
    bytes_in = pr2d.size * pr2d.dtype.itemsize + gt2d.size * gt2d.dtype.itemsize
    cost = pl.CostEstimate(
        flops=16 * n_padded,
        transcendentals=2 * n_padded,
        bytes_accessed=bytes_in + ncores * 4 * 8 * _LANES * 4,
    )

    # TODO(synk): on v7x, pltpu.CORE_PARALLEL / pl.core_map would guarantee the 2-TC
    # split; plain "parallel" is used here as the portable, known-good option.
    partials = pl.pallas_call(
        kernel,
        out_shape=jax.ShapeDtypeStruct((ncores, 4, 8, _LANES), jnp.float32),
        grid_spec=pltpu.PrefetchScalarGridSpec(
            num_scalar_prefetch=0,
            grid=(ncores, nblk),
            in_specs=[
                pl.BlockSpec((block_rows, _LANES), in_index_map),
                pl.BlockSpec((block_rows, _LANES), in_index_map),
            ],
            out_specs=pl.BlockSpec((1, 4, 8, _LANES), lambda i, j: (i, 0, 0, 0)),
        ),
        compiler_params=pltpu.CompilerParams(
            dimension_semantics=("parallel", "arbitrary"),
            vmem_limit_bytes=32 * 1024 * 1024,
        ),
        cost_estimate=cost,
    )(pr2d, gt2d)

    # Tiny final reduction (2 * 4 * 1024 partials) + loss formula on 4 scalars, in JAX.
    # Note: f32 accumulation; for >~1e8 elements expect ~1e-5-class drift vs a pairwise ref.
    sums = jnp.sum(partials, axis=(0, 2, 3))         # (4,) f32
    bce_mean = sums[0] / jnp.float32(n_total)
    sum_pr, sum_gt, tp = sums[1], sums[2], sums[3]
    fp = sum_pr - tp
    fn = sum_gt - tp
    beta2 = beta * beta
    # smp.utils.functional.f_score
    f_score = ((1.0 + beta2) * tp + eps) / ((1.0 + beta2) * tp + beta2 * fn + fp + eps)
    dice = 1.0 - f_score
    # smp.utils.functional.jaccard (IoU)
    jaccard = 1.0 - (tp + eps) / (sum_gt + sum_pr - tp + eps)
    # TODO(synk): threshold / ignore_channels / non-sigmoid activation options of the
    # reference module are not implemented (they default to None / 'sigmoid').
    return dice + bce_mean + jaccard


def _reference_loss(y_pr, y_gt, eps=_EPS, beta=_BETA):
    x = y_pr.astype(jnp.float32)
    y = y_gt.astype(jnp.float32)
    bce = jnp.mean(jnp.maximum(x, 0.0) - x * y + jnp.log1p(jnp.exp(-jnp.abs(x))))
    p = jax.nn.sigmoid(x)
    tp = jnp.sum(y * p)
    fp = jnp.sum(p) - tp
    fn = jnp.sum(y) - tp
    beta2 = beta * beta
    f_score = ((1.0 + beta2) * tp + eps) / ((1.0 + beta2) * tp + beta2 * fn + fp + eps)
    dice = 1.0 - f_score
    union = jnp.sum(y) + jnp.sum(p) - tp + eps
    jaccard = 1.0 - (tp + eps) / union
    return dice + bce + jaccard


if __name__ == "__main__":
    key = jax.random.PRNGKey(0)
    k1, k2 = jax.random.split(key)
    # NCHW: batch=2, channels=4, spatial=16x16 -> 2048 elements
    y_pr = jax.random.normal(k1, (2, 4, 16, 16), dtype=jnp.float32) * 2.0         # logits
    y_gt = (jax.random.uniform(k2, (2, 4, 16, 16)) > 0.5).astype(jnp.float32)     # binary mask

    loss = bce_dice_jaccard_loss(y_pr, y_gt)
    loss = jax.block_until_ready(loss)

    ref = jax.block_until_ready(_reference_loss(y_pr, y_gt))
    assert jnp.allclose(loss, ref, rtol=1e-5, atol=1e-5), (loss, ref)
    print("KERNEL_OK")
</pallas_src>

<mosaic_0001>
module attributes {stable_mosaic.version = 11 : i64} {
  func.func @_loss_kernel(%arg0: i32, %arg1: i32, %arg2: memref<16x128xf32, #tpu.memory_space<vmem>>, %arg3: memref<16x128xf32, #tpu.memory_space<vmem>>, %arg4: memref<1x4x8x128xf32, #tpu.memory_space<vmem>>) attributes {dimension_semantics = [#tpu.dimension_semantics<parallel>, #tpu.dimension_semantics<arbitrary>], iteration_bounds = array<i64: 1, 1>, scalar_prefetch = 0 : i64, scratch_operands = 0 : i64, tpu.core_type = #tpu.core_type<tc>, window_params = [{transform_indices = @transform_0, window_bounds = array<i64: 16, 128>}, {transform_indices = @transform_1, window_bounds = array<i64: 16, 128>}, {transform_indices = @transform_2, window_bounds = array<i64: 1, 4, 8, 128>}]} {
    %c0_i32 = arith.constant 0 : i32
    %0 = arith.cmpi eq, %arg1, %c0_i32 : i32
    %1 = arith.extui %0 : i1 to i32
    %c0_i32_0 = arith.constant 0 : i32
    %2 = arith.cmpi ne, %1, %c0_i32_0 : i32
    scf.if %2 {
      %cst_42 = arith.constant 0.000000e+00 : f32
      %56 = vector.broadcast %cst_42 : f32 to vector<1x4x8x128xf32>
      %c0_43 = arith.constant 0 : index
      %c0_44 = arith.constant 0 : index
      %c0_45 = arith.constant 0 : index
      %c0_46 = arith.constant 0 : index
      %57 = vector.load %arg4[%c0_43, %c0_44, %c0_45, %c0_46] : memref<1x4x8x128xf32, #tpu.memory_space<vmem>>, vector<1x4x8x128xf32>
      tpu.vector_store %arg4[%c0_43, %c0_44, %c0_45, %c0_46], %56 {strides = array<i32>} : memref<1x4x8x128xf32, #tpu.memory_space<vmem>>, vector<1x4x8x128xf32>,
    } else {
    }
    %c0 = arith.constant 0 : index
    %c0_1 = arith.constant 0 : index
    %3 = vector.load %arg2[%c0, %c0_1] : memref<16x128xf32, #tpu.memory_space<vmem>>, vector<16x128xf32>
    %c0_2 = arith.constant 0 : index
    %c0_3 = arith.constant 0 : index
    %4 = vector.load %arg3[%c0_2, %c0_3] : memref<16x128xf32, #tpu.memory_space<vmem>>, vector<16x128xf32>
    %cst = arith.constant 5.000000e-01 : f32
    %5 = vector.broadcast %cst : f32 to vector<16x128xf32>
    %6 = arith.mulf %5, %3 : vector<16x128xf32>
    %7 = math.tanh %6 : vector<16x128xf32>
    %cst_4 = arith.constant 5.000000e-01 : f32
    %8 = vector.broadcast %cst_4 : f32 to vector<16x128xf32>
    %9 = arith.mulf %8, %7 : vector<16x128xf32>
    %cst_5 = arith.constant 5.000000e-01 : f32
    %10 = vector.broadcast %cst_5 : f32 to vector<16x128xf32>
    %11 = arith.addf %10, %9 : vector<16x128xf32>
    %cst_6 = arith.constant 0.000000e+00 : f32
    %12 = vector.broadcast %cst_6 : f32 to vector<16x128xf32>
    %13 = arith.maximumf %3, %12 : vector<16x128xf32>
    %14 = arith.mulf %3, %4 : vector<16x128xf32>
    %15 = arith.subf %13, %14 : vector<16x128xf32>
    %16 = math.absf %7 : vector<16x128xf32>
    %cst_7 = arith.constant 5.000000e-01 : f32
    %17 = vector.broadcast %cst_7 : f32 to vector<16x128xf32>
    %18 = arith.mulf %17, %16 : vector<16x128xf32>
    %cst_8 = arith.constant 5.000000e-01 : f32
    %19 = vector.broadcast %cst_8 : f32 to vector<16x128xf32>
    %20 = arith.addf %19, %18 : vector<16x128xf32>
    %21 = math.log %20 : vector<16x128xf32>
    %22 = arith.subf %15, %21 : vector<16x128xf32>
    %23 = arith.mulf %4, %11 : vector<16x128xf32>
    %c0_9 = arith.constant 0 : index
    %c0_10 = arith.constant 0 : index
    %c0_11 = arith.constant 0 : index
    %c0_12 = arith.constant 0 : index
    %24 = vector.load %arg4[%c0_9, %c0_10, %c0_11, %c0_12] : memref<1x4x8x128xf32, #tpu.memory_space<vmem>>, vector<1x1x8x128xf32>
    %25 = vector.shape_cast %24 : vector<1x1x8x128xf32> to vector<8x128xf32>
    %26 = vector.shape_cast %22 : vector<16x128xf32> to vector<2x8x128xf32>
    %cst_13 = arith.constant dense<0.000000e+00> : vector<8x128xf32>
    %27 = vector.multi_reduction <add>, %26, %cst_13 [0] : vector<2x8x128xf32> to vector<8x128xf32>
    %28 = arith.addf %25, %27 : vector<8x128xf32>
    %c0_14 = arith.constant 0 : index
    %c0_15 = arith.constant 0 : index
    %c0_16 = arith.constant 0 : index
    %c0_17 = arith.constant 0 : index
    %29 = vector.load %arg4[%c0_14, %c0_15, %c0_16, %c0_17] : memref<1x4x8x128xf32, #tpu.memory_space<vmem>>, vector<1x1x8x128xf32>
    %30 = vector.shape_cast %29 : vector<1x1x8x128xf32> to vector<8x128xf32>
    %31 = vector.shape_cast %28 : vector<8x128xf32> to vector<1x1x8x128xf32>
    tpu.vector_store %arg4[%c0_14, %c0_15, %c0_16, %c0_17], %31 {strides = array<i32>} : memref<1x4x8x128xf32, #tpu.memory_space<vmem>>, vector<1x1x8x128xf32>,
    %c0_18 = arith.constant 0 : index
    %c1 = arith.constant 1 : index
    %c0_19 = arith.constant 0 : index
    %c0_20 = arith.constant 0 : index
    %32 = vector.load %arg4[%c0_18, %c1, %c0_19, %c0_20] : memref<1x4x8x128xf32, #tpu.memory_space<vmem>>, vector<1x1x8x128xf32>
    %33 = vector.shape_cast %32 : vector<1x1x8x128xf32> to vector<8x128xf32>
    %34 = vector.shape_cast %11 : vector<16x128xf32> to vector<2x8x128xf32>
    %cst_21 = arith.constant dense<0.000000e+00> : vector<8x128xf32>
    %35 = vector.multi_reduction <add>, %34, %cst_21 [0] : vector<2x8x128xf32> to vector<8x128xf32>
    %36 = arith.addf %33, %35 : vector<8x128xf32>
    %c0_22 = arith.constant 0 : index
    %c1_23 = arith.constant 1 : index
    %c0_24 = arith.constant 0 : index
    %c0_25 = arith.constant 0 : index
    %37 = vector.load %arg4[%c0_22, %c1_23, %c0_24, %c0_25] : memref<1x4x8x128xf32, #tpu.memory_space<vmem>>, vector<1x1x8x128xf32>
    %38 = vector.shape_cast %37 : vector<1x1x8x128xf32> to vector<8x128xf32>
    %39 = vector.shape_cast %36 : vector<8x128xf32> to vector<1x1x8x128xf32>
    tpu.vector_store %arg4[%c0_22, %c1_23, %c0_24, %c0_25], %39 {strides = array<i32>} : memref<1x4x8x128xf32, #tpu.memory_space<vmem>>, vector<1x1x8x128xf32>,
    %c0_26 = arith.constant 0 : index
    %c2 = arith.constant 2 : index
    %c0_27 = arith.constant 0 : index
    %c0_28 = arith.constant 0 : index
    %40 = vector.load %arg4[%c0_26, %c2, %c0_27, %c0_28] : memref<1x4x8x128xf32, #tpu.memory_space<vmem>>, vector<1x1x8x128xf32>
    %41 = vector.shape_cast %40 : vector<1x1x8x128xf32> to vector<8x128xf32>
    %42 = vector.shape_cast %4 : vector<16x128xf32> to vector<2x8x128xf32>
    %cst_29 = arith.constant dense<0.000000e+00> : vector<8x128xf32>
    %43 = vector.multi_reduction <add>, %42, %cst_29 [0] : vector<2x8x128xf32> to vector<8x128xf32>
    %44 = arith.addf %41, %43 : vector<8x128xf32>
    %c0_30 = arith.constant 0 : index
    %c2_31 = arith.constant 2 : index
    %c0_32 = arith.constant 0 : index
    %c0_33 = arith.constant 0 : index
    %45 = vector.load %arg4[%c0_30, %c2_31, %c0_32, %c0_33] : memref<1x4x8x128xf32, #tpu.memory_space<vmem>>, vector<1x1x8x128xf32>
    %46 = vector.shape_cast %45 : vector<1x1x8x128xf32> to vector<8x128xf32>
    %47 = vector.shape_cast %44 : vector<8x128xf32> to vector<1x1x8x128xf32>
    tpu.vector_store %arg4[%c0_30, %c2_31, %c0_32, %c0_33], %47 {strides = array<i32>} : memref<1x4x8x128xf32, #tpu.memory_space<vmem>>, vector<1x1x8x128xf32>,
    %c0_34 = arith.constant 0 : index
    %c3 = arith.constant 3 : index
    %c0_35 = arith.constant 0 : index
    %c0_36 = arith.constant 0 : index
    %48 = vector.load %arg4[%c0_34, %c3, %c0_35, %c0_36] : memref<1x4x8x128xf32, #tpu.memory_space<vmem>>, vector<1x1x8x128xf32>
    %49 = vector.shape_cast %48 : vector<1x1x8x128xf32> to vector<8x128xf32>
    %50 = vector.shape_cast %23 : vector<16x128xf32> to vector<2x8x128xf32>
    %cst_37 = arith.constant dense<0.000000e+00> : vector<8x128xf32>
    %51 = vector.multi_reduction <add>, %50, %cst_37 [0] : vector<2x8x128xf32> to vector<8x128xf32>
    %52 = arith.addf %49, %51 : vector<8x128xf32>
    %c0_38 = arith.constant 0 : index
    %c3_39 = arith.constant 3 : index
    %c0_40 = arith.constant 0 : index
    %c0_41 = arith.constant 0 : index
    %53 = vector.load %arg4[%c0_38, %c3_39, %c0_40, %c0_41] : memref<1x4x8x128xf32, #tpu.memory_space<vmem>>, vector<1x1x8x128xf32>
    %54 = vector.shape_cast %53 : vector<1x1x8x128xf32> to vector<8x128xf32>
    %55 = vector.shape_cast %52 : vector<8x128xf32> to vector<1x1x8x128xf32>
    tpu.vector_store %arg4[%c0_38, %c3_39, %c0_40, %c0_41], %55 {strides = array<i32>} : memref<1x4x8x128xf32, #tpu.memory_space<vmem>>, vector<1x1x8x128xf32>,
    return
  }
  func.func @transform_0(%arg0: i32, %arg1: i32) -> (i32, i32) {
    %c1_i32 = arith.constant 1 : i32
    %0 = arith.muli %arg0, %c1_i32 : i32
    %1 = arith.addi %0, %arg1 : i32
    %c0_i32 = arith.constant 0 : i32
    %c0_i32_0 = arith.constant 0 : i32
    return %1, %c0_i32 : i32, i32
  }
  func.func @transform_1(%arg0: i32, %arg1: i32) -> (i32, i32) {
    %c1_i32 = arith.constant 1 : i32
    %0 = arith.muli %arg0, %c1_i32 : i32
    %1 = arith.addi %0, %arg1 : i32
    %c0_i32 = arith.constant 0 : i32
    %c0_i32_0 = arith.constant 0 : i32
    return %1, %c0_i32 : i32, i32
  }
  func.func @transform_2(%arg0: i32, %arg1: i32) -> (i32, i32, i32, i32) {
    %c0_i32 = arith.constant 0 : i32
    %c0_i32_0 = arith.constant 0 : i32
    %c0_i32_1 = arith.constant 0 : i32
    %c0_i32_2 = arith.constant 0 : i32
    return %arg0, %c0_i32, %c0_i32_0, %c0_i32_1 : i32, i32, i32, i32
  }
}

</mosaic_0001>

<llo_original>
// kernel: tpu_custom_call.1
$region0: #{tpu_custom_call.1}
  #allocation0 [shape = 'u32[]', space=smem, size = 0x4, offset = 0x4, fixed_abs, tag = 'smem constant byte address 0x4 - core index']
  #allocation1 [shape = 'u32[144,128]{1,0:T(1,128)}', space=vmem, size = 0x12000, scoped, tag = 'internal scratch']
  %s0 = inlined_call_operand.hbm [shape: f32[16,128], index: 0, kind: input, shape index: {}]
  %s1 = inlined_call_operand.hbm [shape: f32[16,128], index: 1, kind: input, shape index: {}]
  %s2 = inlined_call_operand.hbm [shape: f32[1,4,8,128], index: 2, kind: output, shape index: {}]
  %s3 = sld [smem:[#allocation0]]
  $region30: #{tpu_custom_call.1} parent=0
    _
  %s5 = ssub.s32 1, %s3
  %s6 = scalar_select 0, %s5, %s3
  $region1: #{tpu_custom_call.1} parent=0
    #allocation2 [shape = 'u8[8192]{0}', space=vmem, size = 0x2000, scoped, tag = 'input window, operand 0, single buffered']
    #allocation3 [shape = 's32[1]{0}', space=sflag, size = 0x4, scoped, tag = 'scoped memory for tpu_custom_call.1']
    #allocation4 [shape = 's32[1]{0}', space=sflag, size = 0x4, scoped, tag = 'scoped memory for tpu_custom_call.1']
    #allocation5 [shape = 'u8[8192]{0}', space=vmem, size = 0x2000, scoped, tag = 'input window, operand 1, single buffered']
    #allocation6 [shape = 's32[1]{0}', space=sflag, size = 0x4, scoped, tag = 'scoped memory for tpu_custom_call.1']
    #allocation7 [shape = 'u8[16384]{0}', space=vmem, size = 0x4000, scoped, tag = 'output window, operand 0, single buffered']
    %7 = vsyncpa [#allocation3], 0
    %8 = vsyncpa [#allocation6], 0
    %9 = vsyncpa [#allocation4], 0
    // Predicated region
    $region2: #{tpu_custom_call.1} parent=1 // pred_check
      _
    $region3: #{tpu_custom_call.1} parent=1 // pred_check_branch
      %11 = sbr.rel (0) target = $region5
    $region4: #{tpu_custom_call.1} parent=1 // pred_region
      %s12 = sadd.s32 0, 0
      %s13 = smul.u32 2, %s12
      %s15 = ssub.s32 256, 256
      %16 = vsyncadd [#allocation3], %s15
      %s17 = smul.addr %s13, 128
      %s18 = scalar_lea.hbm %s0, %s17
      %s19 = sshll.u32 [#allocation2], 4
      %s20 = int_to_ptr.vmem [resolvable:$true] %s19
      %25 = dma.hbm_to_vmem [thread:$0]  %s18, 256, %s20, [#allocation3], 128, 128, 8
    $region5: #{tpu_custom_call.1} parent=1 // pred_fallthru
      _
    // Predicated region
    $region6: #{tpu_custom_call.1} parent=1 // pred_check
      _
    $region7: #{tpu_custom_call.1} parent=1 // pred_check_branch
      %27 = sbr.rel (0) target = $region9
    $region8: #{tpu_custom_call.1} parent=1 // pred_region
      %s28 = sadd.s32 0, 0
      %s29 = smul.u32 2, %s28
      %s31 = ssub.s32 256, 256
      %32 = vsyncadd [#allocation6], %s31
      %s33 = smul.addr %s29, 128
      %s34 = scalar_lea.hbm %s1, %s33
      %s35 = sshll.u32 [#allocation5], 4
      %s36 = int_to_ptr.vmem [resolvable:$true] %s35
      %41 = dma.hbm_to_vmem [thread:$0]  %s34, 256, %s36, [#allocation6], 128, 128, 8
    $region9: #{tpu_custom_call.1} parent=1 // pred_fallthru
      _
    // Predicated region
    $region10: #{tpu_custom_call.1} parent=1 // pred_check
      _
    $region11: #{tpu_custom_call.1} parent=1 // pred_check_branch
      %43 = sbr.rel (0) target = $region13
    $region12: #{tpu_custom_call.1} parent=1 // pred_region
      %44 = dma.done [#allocation3], 256
    $region13: #{tpu_custom_call.1} parent=1 // pred_fallthru
      _
    // Predicated region
    $region14: #{tpu_custom_call.1} parent=1 // pred_check
      _
    $region15: #{tpu_custom_call.1} parent=1 // pred_check_branch
      %46 = sbr.rel (0) target = $region17
    $region16: #{tpu_custom_call.1} parent=1 // pred_region
      %47 = dma.done [#allocation6], 256
    $region17: #{tpu_custom_call.1} parent=1 // pred_fallthru
      _
    %s48 = sadd.s32 0, 0
    %s49 = smul.u32 2, %s48
    %s50 = sadd.s32 0, 0
    %s51 = smul.u32 2, %s50
    %p52 = scmp.eq.s32.totalorder 0, 0
    // Predicated region
    $region18: #{tpu_custom_call.1} parent=1 // pred_check
      %p53 = pneg %p52
    $region19: #{tpu_custom_call.1} parent=1 // pred_check_branch
      %55 = sbr.rel (%p53) target = $region21
    $region20: #{tpu_custom_call.1} parent=1 // pred_region
      %56 = vst [vmem:[#allocation7] sm:$0xff] 0.0
      %57 = vst [vmem:[#allocation7 + $0x8] sm:$0xff] 0.0
      %58 = vst [vmem:[#allocation7 + $0x10] sm:$0xff] 0.0
      %59 = vst [vmem:[#allocation7 + $0x18] sm:$0xff] 0.0
    $region21: #{tpu_custom_call.1} parent=1 // pred_fallthru
      _
    %v60 = vld [vmem:[#allocation2] sm:$0xff]
    %v61 = vld [vmem:[#allocation2 + $0x8] sm:$0xff]
    %v62 = vld [vmem:[#allocation5] sm:$0xff]
    %v63 = vld [vmem:[#allocation5 + $0x8] sm:$0xff]
    %v64 = vmul.f32 %v60, 0.5
    %v65 = vmul.f32 %v61, 0.5
    %v66 = vtanh.pop %v64
    %v67 = vtanh.pop %v65
    %v68 = vmul.f32 %v66, 0.5
    %v69 = vmul.f32 %v67, 0.5
    %v70 = vadd.f32 %v68, 0.5
    %v71 = vadd.f32 %v69, 0.5
    %v72 = vmax.f32 %v60, 0.0
    %v73 = vmax.f32 %v61, 0.0
    %v74 = vmul.f32 %v60, %v62
    %v75 = vmul.f32 %v61, %v63
    %v76 = vsub.f32 %v72, %v74
    %v77 = vsub.f32 %v73, %v75
    %v78 = vand.u32 2147483647, %v66
    %v79 = vand.u32 2147483647, %v67
    %v80 = vmul.f32 %v78, 0.5
    %v81 = vmul.f32 %v79, 0.5
    %v82 = vadd.f32 %v80, 0.5
    %v83 = vadd.f32 %v81, 0.5
    %v84 = vlog2.pop %v82
    %v85 = vmul.f32 %v84, 0.6931472
    %v86 = vlog2.pop %v83
    %v87 = vmul.f32 %v86, 0.6931472
    %v88 = vsub.f32 %v76, %v85
    %v89 = vsub.f32 %v77, %v87
    %v90 = vmul.f32 %v62, %v70
    %v91 = vmul.f32 %v63, %v71
    %v92 = vld [vmem:[#allocation7] sm:$0xff]
    %v93 = vadd.f32 %v88, %v89
    %v94 = vadd.f32 %v92, %v93
    %95 = vst [vmem:[#allocation7] sm:$0xff] %v94
    %s96 = scalar_lea.vmem [#allocation7], 8
    %v97 = vld [vmem:[%s96] sm:$0xff]
    %v98 = vadd.f32 %v70, %v71
    %v99 = vadd.f32 %v97, %v98
    %100 = vst [vmem:[%s96] sm:$0xff] %v99
    %s101 = scalar_lea.vmem [#allocation7], 16
    %v102 = vld [vmem:[%s101] sm:$0xff]
    %v103 = vadd.f32 %v62, %v63
    %v104 = vadd.f32 %v102, %v103
    %105 = vst [vmem:[%s101] sm:$0xff] %v104
    %s106 = scalar_lea.vmem [#allocation7], 24
    %v107 = vld [vmem:[%s106] sm:$0xff]
    %v108 = vadd.f32 %v90, %v91
    %v109 = vadd.f32 %v107, %v108
    %110 = vst [vmem:[%s106] sm:$0xff] %v109
    // Predicated region
    $region22: #{tpu_custom_call.1} parent=1 // pred_check
      _
    $region23: #{tpu_custom_call.1} parent=1 // pred_check_branch
      %112 = sbr.rel (0) target = $region25
    $region24: #{tpu_custom_call.1} parent=1 // pred_region
      %s114 = ssub.s32 512, 512
      %115 = vsyncadd [#allocation4], %s114
      %s116 = sshll.u32 [#allocation7], 4
      %s117 = int_to_ptr.vmem [resolvable:$true] %s116
      %122 = dma.vmem_to_hbm [thread:$0]  %s117, 512, %s2, [#allocation4], 128, 128, 8
    $region25: #{tpu_custom_call.1} parent=1 // pred_fallthru
      _
    // Predicated region
    $region26: #{tpu_custom_call.1} parent=1 // pred_check
      _
    $region27: #{tpu_custom_call.1} parent=1 // pred_check_branch
      %124 = sbr.rel (0) target = $region29
    $region28: #{tpu_custom_call.1} parent=1 // pred_region
      %125 = dma.done [#allocation4], 512
    $region29: #{tpu_custom_call.1} parent=1 // pred_fallthru
      _
    %126 = vsyncpa [#allocation3], 1
    %127 = vsyncpa [#allocation6], 1
    %128 = vsyncpa [#allocation4], 1

</llo_original>
